<compile_context>
chip_gen: v7x
topology: tpu7x:2x2x1
jax: 0.10.0
libtpu: 0.0.40
codegen_flags: <defaults>
</compile_context>

<pallas_src>
import math
from functools import partial

import jax
import jax.numpy as jnp
from jax.experimental import pallas as pl
from jax.experimental.pallas import tpu as pltpu


def _sincos_kernel(x_ref, w_ref, out_ref, *, hp):
    # x_ref:   (TB, 1)     f32  -- timesteps (sublane = batch)
    # w_ref:   (1, HP)     f32  -- zero-padded random weights (lane = feature)
    # out_ref: (TB, 2*HP)  f32  -- [ sin(freqs) | cos(freqs) ], lane-aligned
    x = x_ref[...]                              # (TB, 1)
    w = w_ref[...]                              # (1, HP)
    freqs = x * w * (2.0 * math.pi)             # (TB, HP) broadcast outer product
    # Two full-width (multiple-of-128 lane) unmasked stores; no concat temp.
    out_ref[:, 0:hp] = jnp.sin(freqs)
    out_ref[:, hp:2 * hp] = jnp.cos(freqs)


def random_or_learned_sinusoidal_pos_emb(x, weights, *, tb=None):
    """x: (b,) float timesteps, weights: (half_dim,) -> (b, 2*half_dim + 1).

    Matches PyTorch: concat([x, sin(x*w*2pi), cos(x*w*2pi)], dim=-1).
    """
    b = x.shape[0]
    half_dim = weights.shape[0]

    # Lane-aligned half width (>= 128, multiple of 128).
    hp = ((half_dim + 127) // 128) * 128

    # Batch tile: multiple of 8, capped at 512 rows per block.
    if tb is None:
        tb = 512 if b >= 512 else ((b + 7) // 8) * 8
    b_pad = ((b + tb - 1) // tb) * tb

    x_f32 = x.astype(jnp.float32)
    # Zero-pad inputs (padding rows/lanes are computed but sliced off below).
    x2 = jnp.zeros((b_pad, 1), jnp.float32).at[:b, 0].set(x_f32)
    w2 = jnp.zeros((1, hp), jnp.float32).at[0, :half_dim].set(
        weights.astype(jnp.float32))

    grid = (b_pad // tb,)

    sincos = pl.pallas_call(
        partial(_sincos_kernel, hp=hp),
        out_shape=jax.ShapeDtypeStruct((b_pad, 2 * hp), jnp.float32),
        grid_spec=pltpu.PrefetchScalarGridSpec(
            num_scalar_prefetch=0,
            grid=grid,
            in_specs=[
                pl.BlockSpec((tb, 1), lambda i: (i, 0)),    # x tile
                pl.BlockSpec((1, hp), lambda i: (0, 0)),    # weights (resident)
            ],
            out_specs=pl.BlockSpec((tb, 2 * hp), lambda i: (i, 0)),
        ),
        compiler_params=pltpu.CompilerParams(
            dimension_semantics=("parallel",)),
    )(x2, w2)

    sin_part = sincos[:b, :half_dim]
    cos_part = sincos[:b, hp:hp + half_dim]
    # Prepend the raw timestep column with a cheap XLA concat (fuses upstream).
    return jnp.concatenate([x_f32.reshape(b, 1), sin_part, cos_part], axis=-1)


def reference(x, weights):
    x2 = x[:, None].astype(jnp.float32)
    freqs = x2 * weights[None, :].astype(jnp.float32) * 2.0 * math.pi
    return jnp.concatenate([x2, jnp.sin(freqs), jnp.cos(freqs)], axis=-1)


if __name__ == "__main__":
    dim = 32                      # module arg `dim` (must be even)
    half_dim = dim // 2
    batch = 8

    key = jax.random.PRNGKey(0)
    kx, kw = jax.random.split(key)
    # Deterministic "timesteps" and deterministic randn-like weights.
    x = jax.random.uniform(kx, (batch,), dtype=jnp.float32) * 1000.0
    weights = jax.random.normal(kw, (half_dim,), dtype=jnp.float32)

    out = random_or_learned_sinusoidal_pos_emb(x, weights)
    out = jax.block_until_ready(out)

    ref = reference(x, weights)
    assert out.shape == (batch, dim + 1), out.shape
    assert jnp.allclose(out, ref, atol=1e-5, rtol=1e-5), "mismatch vs reference"

    print("KERNEL_OK")
</pallas_src>

<mosaic_0001>
module attributes {stable_mosaic.version = 11 : i64} {
  func.func @_sincos_kernel(%arg0: i32, %arg1: memref<8x1xf32, #tpu.memory_space<vmem>>, %arg2: memref<1x128xf32, #tpu.memory_space<vmem>>, %arg3: memref<8x256xf32, #tpu.memory_space<vmem>>) attributes {dimension_semantics = [#tpu.dimension_semantics<parallel>], iteration_bounds = array<i64: 1>, scalar_prefetch = 0 : i64, scratch_operands = 0 : i64, tpu.core_type = #tpu.core_type<tc>, window_params = [{transform_indices = @transform_0, window_bounds = array<i64: 8, 1>}, {pipeline_mode = #tpu.pipeline_mode<synchronous>, transform_indices = @transform_1, window_bounds = array<i64: 1, 128>}, {transform_indices = @transform_2, window_bounds = array<i64: 8, 256>}]} {
    %c0 = arith.constant 0 : index
    %c0_0 = arith.constant 0 : index
    %0 = vector.load %arg1[%c0, %c0_0] : memref<8x1xf32, #tpu.memory_space<vmem>>, vector<8x1xf32>
    %c0_1 = arith.constant 0 : index
    %c0_2 = arith.constant 0 : index
    %1 = vector.load %arg2[%c0_1, %c0_2] : memref<1x128xf32, #tpu.memory_space<vmem>>, vector<1x128xf32>
    %2 = vector.broadcast %0 : vector<8x1xf32> to vector<8x128xf32>
    %3 = vector.broadcast %1 : vector<1x128xf32> to vector<8x128xf32>
    %4 = arith.mulf %2, %3 : vector<8x128xf32>
    %cst = arith.constant 6.28318548 : f32
    %5 = vector.broadcast %cst : f32 to vector<8x128xf32>
    %6 = arith.mulf %4, %5 : vector<8x128xf32>
    %7 = math.sin %6 : vector<8x128xf32>
    %c0_3 = arith.constant 0 : index
    %c0_4 = arith.constant 0 : index
    %8 = vector.load %arg3[%c0_3, %c0_4] : memref<8x256xf32, #tpu.memory_space<vmem>>, vector<8x128xf32>
    tpu.vector_store %arg3[%c0_3, %c0_4], %7 {strides = array<i32>} : memref<8x256xf32, #tpu.memory_space<vmem>>, vector<8x128xf32>,
    %9 = math.cos %6 : vector<8x128xf32>
    %c0_5 = arith.constant 0 : index
    %c128 = arith.constant 128 : index
    %10 = vector.load %arg3[%c0_5, %c128] : memref<8x256xf32, #tpu.memory_space<vmem>>, vector<8x128xf32>
    tpu.vector_store %arg3[%c0_5, %c128], %9 {strides = array<i32>} : memref<8x256xf32, #tpu.memory_space<vmem>>, vector<8x128xf32>,
    return
  }
  func.func @transform_0(%arg0: i32) -> (i32, i32) {
    %c0_i32 = arith.constant 0 : i32
    %c0_i32_0 = arith.constant 0 : i32
    return %arg0, %c0_i32 : i32, i32
  }
  func.func @transform_1(%arg0: i32) -> (i32, i32) {
    %c0_i32 = arith.constant 0 : i32
    %c0_i32_0 = arith.constant 0 : i32
    %c0_i32_1 = arith.constant 0 : i32
    return %c0_i32, %c0_i32_0 : i32, i32
  }
  func.func @transform_2(%arg0: i32) -> (i32, i32) {
    %c0_i32 = arith.constant 0 : i32
    %c0_i32_0 = arith.constant 0 : i32
    return %arg0, %c0_i32 : i32, i32
  }
}

</mosaic_0001>

<llo_original>
// kernel: tpu_custom_call.1
$region0: #{tpu_custom_call.1}
  #allocation0 [shape = 'u32[]', space=smem, size = 0x4, offset = 0x4, fixed_abs, tag = 'smem constant byte address 0x4 - core index']
  #allocation1 [shape = 'u32[144,128]{1,0:T(1,128)}', space=vmem, size = 0x12000, scoped, tag = 'internal scratch']
  %s0 = inlined_call_operand.vmem [shape: f32[8,1], index: 0, kind: input, shape index: {}]
  %s1 = inlined_call_operand.vmem [shape: f32[1,128], index: 1, kind: input, shape index: {}]
  %s2 = inlined_call_operand.hbm [shape: f32[8,256], index: 2, kind: output, shape index: {}]
  %s3 = sld [smem:[#allocation0]]
  $region18: #{tpu_custom_call.1} parent=0
    _
  %s5 = ssub.s32 1, %s3
  %s6 = scalar_select 0, %s5, %s3
  $region1: #{tpu_custom_call.1} parent=0
    #allocation2 [shape = 'u8[8192]{0}', space=vmem, size = 0x2000, scoped, tag = 'output window, operand 0, single buffered']
    #allocation3 [shape = 's32[1]{0}', space=sflag, size = 0x4, scoped, tag = 'scoped memory for tpu_custom_call.1']
    %7 = vsyncpa [#allocation3], 0
    // Predicated region
    $region2: #{tpu_custom_call.1} parent=1 // pred_check
      _
    $region3: #{tpu_custom_call.1} parent=1 // pred_check_branch
      %9 = sbr.rel (0) target = $region5
    $region4: #{tpu_custom_call.1} parent=1 // pred_region
      _
    $region5: #{tpu_custom_call.1} parent=1 // pred_fallthru
      _
    // Predicated region
    $region6: #{tpu_custom_call.1} parent=1 // pred_check
      _
    $region7: #{tpu_custom_call.1} parent=1 // pred_check_branch
      %11 = sbr.rel (0) target = $region9
    $region8: #{tpu_custom_call.1} parent=1 // pred_region
      _
    $region9: #{tpu_custom_call.1} parent=1 // pred_fallthru
      _
    %v12 = vld [vmem:[%s0] sm:$0xff]
    %v13 = vld [vmem:[%s1] sm:$0x1]
    %15 = vset.pattern.permute.xlu0 0
    %16 = vperm.xlu0 %15, %v12
    %v17 = vpop.permute.xlu0 %16
    %v20 = vlaneseq
    %v21 = vshrl.u32 %v20, 7
    %v22 = vsub.s32 0, %v21
    %v23 = vrot.slane %v13, %v22
    %v25 = vmul.f32 %v17, %v23
    %v26 = vmul.f32 %v25, 6.2831855
    %v27 = vand.u32 2147483647, %v26
    %vm28 = vcmp.le.f32.partialorder %v27, 0.7853982
    %vm29 = vcmp.lt.s32.totalorder %v26, 0
    %v30 = vand.u32 %v26, 2139095040
    %v31 = vshrl.u32 %v30, 23
    %v32 = vsub.s32 %v31, 127
    %v33 = vand.u32 2147483647, %v26
    %v34 = vand.u32 %v33, 8388607
    %v35 = vor.u32 %v34, 8388608
    %v36 = vsub.s32 0, %v35
    %v37 = vadd.s32 %v32, 1
    %vm38 = vcmp.gt.s32.totalorder %v37, 0
    %v39 = vsel %vm38, %v37, 0
    %v40 = vshrl.u32 %v39, 5
    %v41 = vand.u32 %v39, 31
    %v42 = vsub.s32 32, %v41
    %v43 = vshrl.u32 683565275, %v42
    %v44 = vshll.u32 683565275, %v41
    %v45 = vshrl.u32 2475754826, %v42
    %v46 = vor.u32 %v44, %v45
    %v47 = vshll.u32 2475754826, %v41
    %v48 = vshrl.u32 2131351028, %v42
    %v49 = vor.u32 %v47, %v48
    %v50 = vshll.u32 2131351028, %v41
    %v51 = vshrl.u32 2102212464, %v42
    %v52 = vor.u32 %v50, %v51
    %v53 = vshll.u32 2102212464, %v41
    %v54 = vshrl.u32 920167782, %v42
    %v55 = vor.u32 %v53, %v54
    %v56 = vshll.u32 920167782, %v41
    %v57 = vshrl.u32 1326507024, %v42
    %v58 = vor.u32 %v56, %v57
    %vm59 = vcmp.lt.s32.totalorder %v40, 1
    %vm60 = vcmp.lt.s32.totalorder %v40, 2
    %vm61 = vcmp.lt.s32.totalorder %v40, 3
    %vm62 = vcmp.lt.s32.totalorder %v40, 4
    %v63 = vsel %vm59, %v43, %v46
    %v64 = vsel %vm62, %v52, 2102212464
    %v65 = vsel %vm61, %v49, %v64
    %v66 = vsel %vm60, %v63, %v65
    %v67 = vsel %vm59, %v46, %v49
    %v68 = vsel %vm62, %v55, 920167782
    %v69 = vsel %vm61, %v52, %v68
    %v70 = vsel %vm60, %v67, %v69
    %v71 = vsel %vm59, %v49, %v52
    %v72 = vsel %vm62, %v58, 1326507024
    %v73 = vsel %vm61, %v55, %v72
    %v74 = vsel %vm60, %v71, %v73
    %v75 = vshll.u32 %v35, 8
    %v76 = vmul.u32.u64.compose %v75, %v74
    %v77 = vextract.low.u32 %v76
    %v78 = vextract.high.u32 %v76
    %v79 = vmul.u32.u64.compose %v75, %v70
    %v80 = vextract.low.u32 %v79
    %v81 = vextract.high.u32 %v79
    %v82 = vmul.u32 %v75, %v66
    %v83 = vadd.s32 %v78, %v80
    %vm84 = vc.u32 %v78, %v80
    %v85 = vadd.s32 %v81, 1
    %v86 = vsel %vm84, %v85, %v81
    %v87 = vadd.s32 %v82, %v86
    %v88 = vadd.s32 %v87, 536870912
    %v89 = vshrl.u32 %v88, 30
    %v90 = vshll.u32 %v89, 30
    %v91 = vsub.s32 %v87, %v90
    %vm92 = vcmp.lt.s32.totalorder %v91, 0
    %v93 = vsub.s32 0, %v91
    %v94 = vsel %vm92, %v93, %v91
    %v95 = vclz %v94
    %v96 = vsub.s32 %v95, 2
    %vm97 = vcmp.gt.s32.totalorder 0, %v96
    %v98 = vsel %vm97, 0, %v96
    %v99 = vsub.s32 32, %v98
    %v100 = vshll.u32 %v91, %v98
    %v101 = vshrl.u32 %v83, %v99
    %v102 = vor.u32 %v100, %v101
    %v103 = vsub.s32 4294967266, %v98
    %v104 = vadd.s32 %v103, 127
    %v105 = vshll.u32 %v104, 23
    %v106 = vor.u32 4788187, %v105
    %v107 = vand.u32 2147483647, %v106
    %v109 = vcvt.s32.f32 %v102
    %v110 = vmul.f32 %v109, %v107
    %v111 = vxor.u32 %v110, 2147483648
    %v112 = vsel %vm29, %v111, %v110
    %v113 = vsub.s32 4, %v89
    %v114 = vsel %vm29, %v113, %v89
    %v115 = vsel %vm28, %v26, %v112
    %v116 = vsel %vm28, 0, %v114
    %v117 = vcosq.f32.pop %v115
    %v118 = vsinq.f32.pop %v115
    %vm119 = vweird.f32 %v26
    %v120 = vadd.s32 %v116, 3
    %v121 = vand.u32 %v120, 3
    %vm122 = vcmp.lt.s32.totalorder %v121, 2
    %vm123 = vcmp.eq.s32.totalorder %v121, 0
    %v124 = vxor.u32 %v118, 2147483648
    %v125 = vsel %vm123, %v117, %v124
    %vm126 = vcmp.eq.s32.totalorder %v121, 2
    %v127 = vxor.u32 %v117, 2147483648
    %v128 = vsel %vm126, %v127, %v118
    %v129 = vsel %vm122, %v125, %v128
    %v130 = vsel %vm119, nan, %v129
    %131 = vst [vmem:[#allocation2] sm:$0xff] %v130
    %v132 = vand.u32 2147483647, %v26
    %vm133 = vcmp.le.f32.partialorder %v132, 0.7853982
    %vm134 = vcmp.lt.s32.totalorder %v26, 0
    %v135 = vand.u32 %v26, 2139095040
    %v136 = vshrl.u32 %v135, 23
    %v137 = vsub.s32 %v136, 127
    %v138 = vand.u32 2147483647, %v26
    %v139 = vand.u32 %v138, 8388607
    %v140 = vor.u32 %v139, 8388608
    %v141 = vsub.s32 0, %v140
    %v142 = vadd.s32 %v137, 1
    %vm143 = vcmp.gt.s32.totalorder %v142, 0
    %v144 = vsel %vm143, %v142, 0
    %v145 = vshrl.u32 %v144, 5
    %v146 = vand.u32 %v144, 31
    %v147 = vsub.s32 32, %v146
    %v148 = vshrl.u32 683565275, %v147
    %v149 = vshll.u32 683565275, %v146
    %v150 = vshrl.u32 2475754826, %v147
    %v151 = vor.u32 %v149, %v150
    %v152 = vshll.u32 2475754826, %v146
    %v153 = vshrl.u32 2131351028, %v147
    %v154 = vor.u32 %v152, %v153
    %v155 = vshll.u32 2131351028, %v146
    %v156 = vshrl.u32 2102212464, %v147
    %v157 = vor.u32 %v155, %v156
    %v158 = vshll.u32 2102212464, %v146
    %v159 = vshrl.u32 920167782, %v147
    %v160 = vor.u32 %v158, %v159
    %v161 = vshll.u32 920167782, %v146
    %v162 = vshrl.u32 1326507024, %v147
    %v163 = vor.u32 %v161, %v162
    %vm164 = vcmp.lt.s32.totalorder %v145, 1
    %vm165 = vcmp.lt.s32.totalorder %v145, 2
    %vm166 = vcmp.lt.s32.totalorder %v145, 3
    %vm167 = vcmp.lt.s32.totalorder %v145, 4
    %v168 = vsel %vm164, %v148, %v151
    %v169 = vsel %vm167, %v157, 2102212464
    %v170 = vsel %vm166, %v154, %v169
    %v171 = vsel %vm165, %v168, %v170
    %v172 = vsel %vm164, %v151, %v154
    %v173 = vsel %vm167, %v160, 920167782
    %v174 = vsel %vm166, %v157, %v173
    %v175 = vsel %vm165, %v172, %v174
    %v176 = vsel %vm164, %v154, %v157
    %v177 = vsel %vm167, %v163, 1326507024
    %v178 = vsel %vm166, %v160, %v177
    %v179 = vsel %vm165, %v176, %v178
    %v180 = vshll.u32 %v140, 8
    %v181 = vmul.u32.u64.compose %v180, %v179
    %v182 = vextract.low.u32 %v181
    %v183 = vextract.high.u32 %v181
    %v184 = vmul.u32.u64.compose %v180, %v175
    %v185 = vextract.low.u32 %v184
    %v186 = vextract.high.u32 %v184
    %v187 = vmul.u32 %v180, %v171
    %v188 = vadd.s32 %v183, %v185
    %vm189 = vc.u32 %v183, %v185
    %v190 = vadd.s32 %v186, 1
    %v191 = vsel %vm189, %v190, %v186
    %v192 = vadd.s32 %v187, %v191
    %v193 = vadd.s32 %v192, 536870912
    %v194 = vshrl.u32 %v193, 30
    %v195 = vshll.u32 %v194, 30
    %v196 = vsub.s32 %v192, %v195
    %vm197 = vcmp.lt.s32.totalorder %v196, 0
    %v198 = vsub.s32 0, %v196
    %v199 = vsel %vm197, %v198, %v196
    %v200 = vclz %v199
    %v201 = vsub.s32 %v200, 2
    %vm202 = vcmp.gt.s32.totalorder 0, %v201
    %v203 = vsel %vm202, 0, %v201
    %v204 = vsub.s32 32, %v203
    %v205 = vshll.u32 %v196, %v203
    %v206 = vshrl.u32 %v188, %v204
    %v207 = vor.u32 %v205, %v206
    %v208 = vsub.s32 4294967266, %v203
    %v209 = vadd.s32 %v208, 127
    %v210 = vshll.u32 %v209, 23
    %v211 = vor.u32 4788187, %v210
    %v212 = vand.u32 2147483647, %v211
    %v214 = vcvt.s32.f32 %v207
    %v215 = vmul.f32 %v214, %v212
    %v216 = vxor.u32 %v215, 2147483648
    %v217 = vsel %vm134, %v216, %v215
    %v218 = vsub.s32 4, %v194
    %v219 = vsel %vm134, %v218, %v194
    %v220 = vsel %vm133, %v26, %v217
    %v221 = vsel %vm133, 0, %v219
    %v222 = vcosq.f32.pop %v220
    %v223 = vsinq.f32.pop %v220
    %vm224 = vweird.f32 %v26
    %v225 = vand.u32 %v221, 3
    %vm226 = vcmp.lt.s32.totalorder %v225, 2
    %vm227 = vcmp.eq.s32.totalorder %v225, 0
    %v228 = vxor.u32 %v223, 2147483648
    %v229 = vsel %vm227, %v222, %v228
    %vm230 = vcmp.eq.s32.totalorder %v225, 2
    %v231 = vxor.u32 %v222, 2147483648
    %v232 = vsel %vm230, %v231, %v223
    %v233 = vsel %vm226, %v229, %v232
    %v234 = vsel %vm224, nan, %v233
    %235 = vst [vmem:[#allocation2 + $0x8] sm:$0xff] %v234
    // Predicated region
    $region10: #{tpu_custom_call.1} parent=1 // pred_check
      _
    $region11: #{tpu_custom_call.1} parent=1 // pred_check_branch
      %237 = sbr.rel (0) target = $region13
    $region12: #{tpu_custom_call.1} parent=1 // pred_region
      %s239 = ssub.s32 256, 256
      %240 = vsyncadd [#allocation3], %s239
      %s242 = sshll.u32 [#allocation2], 4
      %s243 = int_to_ptr.vmem [resolvable:$true] %s242
      %245 = dma.vmem_to_hbm [thread:$0]  %s243, 256, %s2, [#allocation3]
    $region13: #{tpu_custom_call.1} parent=1 // pred_fallthru
      _
    // Predicated region
    $region14: #{tpu_custom_call.1} parent=1 // pred_check
      _
    $region15: #{tpu_custom_call.1} parent=1 // pred_check_branch
      %247 = sbr.rel (0) target = $region17
    $region16: #{tpu_custom_call.1} parent=1 // pred_region
      %248 = dma.done [#allocation3], 256
    $region17: #{tpu_custom_call.1} parent=1 // pred_fallthru
      _
    %249 = vsyncpa [#allocation3], 1

</llo_original>
